<compile_context>
chip_gen: v5e
topology: v5e:2x2
jax: 0.10.0
libtpu: 0.0.40
codegen_flags: <defaults>
</compile_context>

<pallas_src>
import math

import jax
import jax.numpy as jnp
from jax import lax
from jax.experimental import pallas as pl
from jax.experimental.pallas import tpu as pltpu


def _round_up(x, m):
    return ((x + m - 1) // m) * m


def _critic_kernel(x_ref, w1_ref, w2_ref, w3r_ref, b12_ref, b3_ref, out_ref):
    # Fused layer 1 (both branches): h = [f a] @ [W11 | W21] + [b11 | b21] -> (TB, 2H)
    h = jnp.dot(x_ref[...], w1_ref[...], preferred_element_type=jnp.float32)
    h = jnp.maximum(h + b12_ref[0:1, :], 0.0)

    # Fused layer 2: block-diagonal weight keeps the two branches independent.
    h = jnp.dot(h, w2_ref[...], preferred_element_type=jnp.float32) + b12_ref[1:2, :]
    h = jnp.maximum(h, 0.0)

    # Fused head: contract on the hidden dim of both operands so the result is
    # emitted directly as (2, TB) — lane-dense stores (batch on the lane axis).
    # TODO(synk): verify via pl.lower_as_mlir that Mosaic does not add a
    # per-step XLU relayout for this contraction; at these widths (K=2H<=512)
    # it sits well under the DMA slack of this memory-bound kernel.
    q_t = lax.dot_general(
        w3r_ref[...], h,
        dimension_numbers=(((1,), (1,)), ((), ())),
        preferred_element_type=jnp.float32,
    )
    out_ref[...] = (q_t + b3_ref[...]).astype(out_ref.dtype)


def _init_linear(key, in_features, out_features):
    """PyTorch nn.Linear default init: U(-1/sqrt(fan_in), 1/sqrt(fan_in))."""
    kw, kb = jax.random.split(key)
    bound = 1.0 / math.sqrt(in_features)
    w = jax.random.uniform(kw, (out_features, in_features), jnp.float32, -bound, bound)
    b = jax.random.uniform(kb, (out_features,), jnp.float32, -bound, bound)
    return w, b


def init_critic_params(key, latent_size, action_size, base_depth):
    in_dim = latent_size + action_size
    keys = jax.random.split(key, 6)
    params = {}
    params["l_1_1"] = _init_linear(keys[0], in_dim, base_depth)
    params["l_1_2"] = _init_linear(keys[1], base_depth, base_depth)
    params["l_1_3"] = _init_linear(keys[2], base_depth, 1)
    params["l_2_1"] = _init_linear(keys[3], in_dim, base_depth)
    params["l_2_2"] = _init_linear(keys[4], base_depth, base_depth)
    params["l_2_3"] = _init_linear(keys[5], base_depth, 1)
    return params


def _choose_tile(B, block_b):
    """Batch tile: 128-multiple unless it spans the whole batch (no padding needed)."""
    block_b = max(128, _round_up(block_b, 128))   # never rely on caller alignment
    if B <= 256:
        return B                                   # single full-extent block
    if B <= block_b:
        # >= 2 grid steps so the "parallel" axis shards across both v7x TCs.
        return _round_up((B + 1) // 2, 128)
    return block_b


def critic_forward(features, action, params, *, block_b=2048):
    """Pallas implementation of CriticNetwork.forward -> (q1, q2)."""
    f32 = jnp.float32
    B, latent = features.shape
    act_dim = action.shape[1]
    in_dim = latent + act_dim

    # Single merged activation stream (done once in XLA; far cheaper than a
    # second 128-lane-padded VMEM buffer + DMA stream per grid step).
    x = jnp.concatenate([features.astype(f32), action.astype(f32)], axis=-1)

    w11, b11 = params["l_1_1"]; w12, b12 = params["l_1_2"]; w13, b13 = params["l_1_3"]
    w21, b21 = params["l_2_1"]; w22, b22 = params["l_2_2"]; w23, b23 = params["l_2_3"]
    H = w11.shape[0]
    H2 = 2 * H

    # ---- wrapper-side weight/bias fusion (layout plumbing, done once) ----
    w1 = jnp.concatenate([w11.T, w21.T], axis=1).astype(f32)           # (in_dim, 2H)
    z_hh = jnp.zeros((H, H), f32)
    w2 = jnp.concatenate(
        [jnp.concatenate([w12.T.astype(f32), z_hh], axis=1),
         jnp.concatenate([z_hh, w22.T.astype(f32)], axis=1)], axis=0)  # (2H, 2H) block-diag
    z_1h = jnp.zeros((1, H), f32)
    w3r = jnp.concatenate(
        [jnp.concatenate([w13.astype(f32), z_1h], axis=1),
         jnp.concatenate([z_1h, w23.astype(f32)], axis=1)], axis=0)    # (2, 2H) heads as rows
    b12_pack = jnp.stack(
        [jnp.concatenate([b11, b21]), jnp.concatenate([b12, b22])], axis=0
    ).astype(f32)                                                       # (2, 2H)
    b3_pack = jnp.stack([b13, b23], axis=0).astype(f32)                 # (2, 1)

    # ---- batch tiling (no padding; ragged tail block handled by Pallas) ----
    tb = _choose_tile(B, block_b)
    grid = (pl.cdiv(B, tb),)
    resident = lambda i: (0, 0)  # weights/biases stay in VMEM across the grid

    out = pl.pallas_call(
        _critic_kernel,
        out_shape=jax.ShapeDtypeStruct((2, B), f32),
        grid_spec=pltpu.PrefetchScalarGridSpec(
            num_scalar_prefetch=0,
            grid=grid,
            in_specs=[
                pl.BlockSpec((tb, in_dim), lambda i: (i, 0)),
                pl.BlockSpec((in_dim, H2), resident),
                pl.BlockSpec((H2, H2), resident),
                pl.BlockSpec((2, H2), resident),
                pl.BlockSpec((2, H2), resident),
                pl.BlockSpec((2, 1), resident),
            ],
            out_specs=pl.BlockSpec((2, tb), lambda i: (0, i)),
        ),
        compiler_params=pltpu.CompilerParams(
            dimension_semantics=("parallel",),
        ),
    )(x, w1, w2, w3r, b12_pack, b3_pack)

    q1 = out[0][:, None]
    q2 = out[1][:, None]
    return q1, q2


def critic_forward_ref(features, action, params):
    """Pure-JAX reference for correctness checking."""
    x = jnp.concatenate([features, action], axis=-1)

    def lin(name, h):
        w, b = params[name]
        return h @ w.T + b

    h1 = jax.nn.relu(lin("l_1_1", x))
    h1 = jax.nn.relu(lin("l_1_2", h1))
    q1 = lin("l_1_3", h1)
    h2 = jax.nn.relu(lin("l_2_1", x))
    h2 = jax.nn.relu(lin("l_2_2", h2))
    q2 = lin("l_2_3", h2)
    return q1, q2


if __name__ == "__main__":
    # Small shapes consistent with the module: latent=24, action=8, hidden=32.
    latent_size = 24
    action_size = 8
    base_depth = 32

    key = jax.random.PRNGKey(0)
    k_feat, k_act, k_params = jax.random.split(key, 3)
    params = init_critic_params(k_params, latent_size, action_size, base_depth)

    # Check 1: tiny batch -> single full-extent block, no padding at all.
    batch = 8
    features = jax.random.normal(k_feat, (batch, latent_size), jnp.float32)
    action = jax.random.normal(k_act, (batch, action_size), jnp.float32)
    q1, q2 = critic_forward(features, action, params)
    jax.block_until_ready((q1, q2))
    q1_ref, q2_ref = critic_forward_ref(features, action, params)
    assert q1.shape == (batch, 1) and q2.shape == (batch, 1)
    assert jnp.allclose(q1, q1_ref, atol=1e-4, rtol=1e-4)
    assert jnp.allclose(q2, q2_ref, atol=1e-4, rtol=1e-4)

    # Check 2: mid batch -> 2 grid steps (v7x dual-TC path) with a ragged tail
    # block (no wrapper-side padding), lane-dense blocked output.
    batch2 = 300
    k_feat2, k_act2 = jax.random.split(jax.random.PRNGKey(1))
    features2 = jax.random.normal(k_feat2, (batch2, latent_size), jnp.float32)
    action2 = jax.random.normal(k_act2, (batch2, action_size), jnp.float32)
    q1b, q2b = critic_forward(features2, action2, params)
    jax.block_until_ready((q1b, q2b))
    q1b_ref, q2b_ref = critic_forward_ref(features2, action2, params)
    assert q1b.shape == (batch2, 1) and q2b.shape == (batch2, 1)
    assert jnp.allclose(q1b, q1b_ref, atol=1e-4, rtol=1e-4)
    assert jnp.allclose(q2b, q2b_ref, atol=1e-4, rtol=1e-4)

    # Check 3: larger batch with small (and deliberately unaligned) block_b to
    # exercise the 128-multiple tile guard and a multi-step grid + ragged tail.
    batch3 = 1000
    k_feat3, k_act3 = jax.random.split(jax.random.PRNGKey(2))
    features3 = jax.random.normal(k_feat3, (batch3, latent_size), jnp.float32)
    action3 = jax.random.normal(k_act3, (batch3, action_size), jnp.float32)
    q1c, q2c = critic_forward(features3, action3, params, block_b=200)
    jax.block_until_ready((q1c, q2c))
    q1c_ref, q2c_ref = critic_forward_ref(features3, action3, params)
    assert q1c.shape == (batch3, 1) and q2c.shape == (batch3, 1)
    assert jnp.allclose(q1c, q1c_ref, atol=1e-4, rtol=1e-4)
    assert jnp.allclose(q2c, q2c_ref, atol=1e-4, rtol=1e-4)

    print("KERNEL_OK")
</pallas_src>

<mosaic_0001>
module attributes {stable_mosaic.version = 11 : i64} {
  func.func @_critic_kernel(%arg0: i32, %arg1: memref<8x32xf32, #tpu.memory_space<vmem>>, %arg2: memref<32x64xf32, #tpu.memory_space<vmem>>, %arg3: memref<64x64xf32, #tpu.memory_space<vmem>>, %arg4: memref<2x64xf32, #tpu.memory_space<vmem>>, %arg5: memref<2x64xf32, #tpu.memory_space<vmem>>, %arg6: memref<2x1xf32, #tpu.memory_space<vmem>>, %arg7: memref<2x8xf32, #tpu.memory_space<vmem>>) attributes {dimension_semantics = [#tpu.dimension_semantics<parallel>], iteration_bounds = array<i64: 1>, scalar_prefetch = 0 : i64, scratch_operands = 0 : i64, tpu.core_type = #tpu.core_type<tc>, window_params = [{transform_indices = @transform_0, window_bounds = array<i64: 8, 32>}, {pipeline_mode = #tpu.pipeline_mode<synchronous>, transform_indices = @transform_1, window_bounds = array<i64: 32, 64>}, {pipeline_mode = #tpu.pipeline_mode<synchronous>, transform_indices = @transform_2, window_bounds = array<i64: 64, 64>}, {pipeline_mode = #tpu.pipeline_mode<synchronous>, transform_indices = @transform_3, window_bounds = array<i64: 2, 64>}, {pipeline_mode = #tpu.pipeline_mode<synchronous>, transform_indices = @transform_4, window_bounds = array<i64: 2, 64>}, {pipeline_mode = #tpu.pipeline_mode<synchronous>, transform_indices = @transform_5, window_bounds = array<i64: 2, 1>}, {transform_indices = @transform_6, window_bounds = array<i64: 2, 8>}]} {
    %c0 = arith.constant 0 : index
    %c0_0 = arith.constant 0 : index
    %0 = vector.load %arg1[%c0, %c0_0] : memref<8x32xf32, #tpu.memory_space<vmem>>, vector<8x32xf32>
    %c0_1 = arith.constant 0 : index
    %c0_2 = arith.constant 0 : index
    %1 = vector.load %arg2[%c0_1, %c0_2] : memref<32x64xf32, #tpu.memory_space<vmem>>, vector<32x64xf32>
    %cst = arith.constant dense<0.000000e+00> : vector<8x64xf32>
    %2 = tpu.matmul %0, %1, %cst {dimension_numbers = #tpu.dot_dimension_numbers<[1], [0], [0], [1], [0, 0, 1, 1], [], []>} : vector<8x32xf32>, vector<32x64xf32>, vector<8x64xf32> -> vector<8x64xf32>
    %c0_3 = arith.constant 0 : index
    %c0_4 = arith.constant 0 : index
    %3 = vector.load %arg5[%c0_3, %c0_4] : memref<2x64xf32, #tpu.memory_space<vmem>>, vector<1x64xf32>
    %4 = vector.broadcast %3 : vector<1x64xf32> to vector<8x64xf32>
    %5 = arith.addf %2, %4 : vector<8x64xf32>
    %cst_5 = arith.constant 0.000000e+00 : f32
    %6 = vector.broadcast %cst_5 : f32 to vector<8x64xf32>
    %7 = arith.maximumf %5, %6 : vector<8x64xf32>
    %c0_6 = arith.constant 0 : index
    %c0_7 = arith.constant 0 : index
    %8 = vector.load %arg3[%c0_6, %c0_7] : memref<64x64xf32, #tpu.memory_space<vmem>>, vector<64x64xf32>
    %cst_8 = arith.constant dense<0.000000e+00> : vector<8x64xf32>
    %9 = tpu.matmul %7, %8, %cst_8 {dimension_numbers = #tpu.dot_dimension_numbers<[1], [0], [0], [1], [0, 0, 1, 1], [], []>} : vector<8x64xf32>, vector<64x64xf32>, vector<8x64xf32> -> vector<8x64xf32>
    %c1 = arith.constant 1 : index
    %c0_9 = arith.constant 0 : index
    %10 = vector.load %arg5[%c1, %c0_9] : memref<2x64xf32, #tpu.memory_space<vmem>>, vector<1x64xf32>
    %11 = vector.broadcast %10 : vector<1x64xf32> to vector<8x64xf32>
    %12 = arith.addf %9, %11 : vector<8x64xf32>
    %cst_10 = arith.constant 0.000000e+00 : f32
    %13 = vector.broadcast %cst_10 : f32 to vector<8x64xf32>
    %14 = arith.maximumf %12, %13 : vector<8x64xf32>
    %c0_11 = arith.constant 0 : index
    %c0_12 = arith.constant 0 : index
    %15 = vector.load %arg4[%c0_11, %c0_12] : memref<2x64xf32, #tpu.memory_space<vmem>>, vector<2x64xf32>
    %cst_13 = arith.constant dense<0.000000e+00> : vector<2x8xf32>
    %16 = tpu.matmul %15, %14, %cst_13 {dimension_numbers = #tpu.dot_dimension_numbers<[1], [1], [0], [0], [0, 0, 1, 0], [], []>} : vector<2x64xf32>, vector<8x64xf32>, vector<2x8xf32> -> vector<2x8xf32>
    %c0_14 = arith.constant 0 : index
    %c0_15 = arith.constant 0 : index
    %17 = vector.load %arg6[%c0_14, %c0_15] : memref<2x1xf32, #tpu.memory_space<vmem>>, vector<2x1xf32>
    %18 = vector.broadcast %17 : vector<2x1xf32> to vector<2x8xf32>
    %19 = arith.addf %16, %18 : vector<2x8xf32>
    %c0_16 = arith.constant 0 : index
    %c0_17 = arith.constant 0 : index
    %20 = vector.load %arg7[%c0_16, %c0_17] : memref<2x8xf32, #tpu.memory_space<vmem>>, vector<2x8xf32>
    tpu.vector_store %arg7[%c0_16, %c0_17], %19 {strides = array<i32>} : memref<2x8xf32, #tpu.memory_space<vmem>>, vector<2x8xf32>,
    return
  }
  func.func @transform_0(%arg0: i32) -> (i32, i32) {
    %c0_i32 = arith.constant 0 : i32
    %c0_i32_0 = arith.constant 0 : i32
    return %arg0, %c0_i32 : i32, i32
  }
  func.func @transform_1(%arg0: i32) -> (i32, i32) {
    %c0_i32 = arith.constant 0 : i32
    %c0_i32_0 = arith.constant 0 : i32
    %c0_i32_1 = arith.constant 0 : i32
    return %c0_i32, %c0_i32_0 : i32, i32
  }
  func.func @transform_2(%arg0: i32) -> (i32, i32) {
    %c0_i32 = arith.constant 0 : i32
    %c0_i32_0 = arith.constant 0 : i32
    %c0_i32_1 = arith.constant 0 : i32
    return %c0_i32, %c0_i32_0 : i32, i32
  }
  func.func @transform_3(%arg0: i32) -> (i32, i32) {
    %c0_i32 = arith.constant 0 : i32
    %c0_i32_0 = arith.constant 0 : i32
    %c0_i32_1 = arith.constant 0 : i32
    return %c0_i32, %c0_i32_0 : i32, i32
  }
  func.func @transform_4(%arg0: i32) -> (i32, i32) {
    %c0_i32 = arith.constant 0 : i32
    %c0_i32_0 = arith.constant 0 : i32
    %c0_i32_1 = arith.constant 0 : i32
    return %c0_i32, %c0_i32_0 : i32, i32
  }
  func.func @transform_5(%arg0: i32) -> (i32, i32) {
    %c0_i32 = arith.constant 0 : i32
    %c0_i32_0 = arith.constant 0 : i32
    %c0_i32_1 = arith.constant 0 : i32
    return %c0_i32, %c0_i32_0 : i32, i32
  }
  func.func @transform_6(%arg0: i32) -> (i32, i32) {
    %c0_i32 = arith.constant 0 : i32
    %c0_i32_0 = arith.constant 0 : i32
    return %c0_i32, %arg0 : i32, i32
  }
}

</mosaic_0001>

<llo_original>
// kernel: tpu_custom_call.1
$region0: #{tpu_custom_call.1}
  #allocation0 [shape = 'u32[]', space=smem, size = 0x4, offset = 0x4, fixed_abs, tag = 'smem constant byte address 0x4 - core index']
  #allocation1 [shape = 'u32[72,128]{1,0:T(1,128)}', space=vmem, size = 0x9000, scoped, tag = 'internal scratch']
  %s0 = inlined_call_operand.hbm [shape: f32[8,32], index: 0, kind: input, shape index: {}]
  %s1 = inlined_call_operand.hbm [shape: f32[32,64], index: 1, kind: input, shape index: {}]
  %s2 = inlined_call_operand.hbm [shape: f32[64,64], index: 2, kind: input, shape index: {}]
  %s3 = inlined_call_operand.vmem [shape: f32[2,64], index: 3, kind: input, shape index: {}]
  %s4 = inlined_call_operand.vmem [shape: f32[2,64], index: 4, kind: input, shape index: {}]
  %s5 = inlined_call_operand.vmem [shape: f32[2,1], index: 5, kind: input, shape index: {}]
  %s6 = inlined_call_operand.hbm [shape: f32[2,8], index: 6, kind: output, shape index: {}]
  %s7 = sld [smem:[#allocation0]]
  $region46: #{tpu_custom_call.1} parent=0
    _
  %s9 = ssub.s32 1, %s7
  %s10 = scalar_select 0, %s9, %s7
  $region1: #{tpu_custom_call.1} parent=0
    #allocation2 [shape = 'u8[4096]{0}', space=vmem, size = 0x1000, scoped, tag = 'input window, operand 0, single buffered']
    #allocation3 [shape = 's32[1]{0}', space=sflag, size = 0x4, scoped, tag = 'scoped memory for tpu_custom_call.1']
    #allocation4 [shape = 's32[1]{0}', space=sflag, size = 0x4, scoped, tag = 'scoped memory for tpu_custom_call.1']
    #allocation5 [shape = 'u8[16384]{0}', space=vmem, size = 0x4000, scoped, tag = 'input window, operand 1, single buffered']
    #allocation6 [shape = 's32[1]{0}', space=sflag, size = 0x4, scoped, tag = 'scoped memory for tpu_custom_call.1']
    #allocation7 [shape = 'u8[32768]{0}', space=vmem, size = 0x8000, scoped, tag = 'input window, operand 2, single buffered']
    #allocation8 [shape = 'u8[1024]{0}', space=vmem, size = 0x400, scoped, tag = 'output window, operand 0, single buffered']
    %11 = vsyncpa [#allocation3], 0
    %12 = vsyncpa [#allocation6], 0
    %13 = vsyncpa [#allocation4], 0
    // Predicated region
    $region2: #{tpu_custom_call.1} parent=1 // pred_check
      _
    $region3: #{tpu_custom_call.1} parent=1 // pred_check_branch
      %15 = sbr.rel (0) target = $region5
    $region4: #{tpu_custom_call.1} parent=1 // pred_region
      %17 = vsyncadd [#allocation3], 0
      %s19 = sshll.u32 %s0, 4
      %s20 = int_to_ptr.hbm [resolvable:$true] %s19
      %s21 = sshll.u32 [#allocation2], 4
      %s22 = int_to_ptr.vmem [resolvable:$true] %s21
      %24 = dma.hbm_to_vmem [thread:$0]  %s20, 128, %s22, [#allocation3]
    $region5: #{tpu_custom_call.1} parent=1 // pred_fallthru
      _
    // Predicated region
    $region6: #{tpu_custom_call.1} parent=1 // pred_check
      _
    $region7: #{tpu_custom_call.1} parent=1 // pred_check_branch
      %26 = sbr.rel (0) target = $region9
    $region8: #{tpu_custom_call.1} parent=1 // pred_region
      %28 = vsyncadd [#allocation6], 0
      %s29 = sshll.u32 %s1, 4
      %s30 = int_to_ptr.hbm [resolvable:$true] %s29
      %s31 = sshll.u32 [#allocation5], 4
      %s32 = int_to_ptr.vmem [resolvable:$true] %s31
      %37 = dma.hbm_to_vmem [thread:$0]  %s30, 512, %s32, [#allocation6], 128, 128, 8
    $region9: #{tpu_custom_call.1} parent=1 // pred_fallthru
      _
    // Predicated region
    $region10: #{tpu_custom_call.1} parent=1 // pred_check
      _
    $region11: #{tpu_custom_call.1} parent=1 // pred_check_branch
      %39 = sbr.rel (0) target = $region13
    $region12: #{tpu_custom_call.1} parent=1 // pred_region
      %41 = vsyncadd [#allocation6], 0
      %s42 = sshll.u32 %s2, 4
      %s43 = int_to_ptr.hbm [resolvable:$true] %s42
      %s44 = sshll.u32 [#allocation7], 4
      %s45 = int_to_ptr.vmem [resolvable:$true] %s44
      %50 = dma.hbm_to_vmem [thread:$0]  %s43, 1024, %s45, [#allocation6], 128, 128, 8
    $region13: #{tpu_custom_call.1} parent=1 // pred_fallthru
      _
    // Predicated region
    $region14: #{tpu_custom_call.1} parent=1 // pred_check
      _
    $region15: #{tpu_custom_call.1} parent=1 // pred_check_branch
      %52 = sbr.rel (0) target = $region17
    $region16: #{tpu_custom_call.1} parent=1 // pred_region
      _
    $region17: #{tpu_custom_call.1} parent=1 // pred_fallthru
      _
    // Predicated region
    $region18: #{tpu_custom_call.1} parent=1 // pred_check
      _
    $region19: #{tpu_custom_call.1} parent=1 // pred_check_branch
      %54 = sbr.rel (0) target = $region21
    $region20: #{tpu_custom_call.1} parent=1 // pred_region
      _
    $region21: #{tpu_custom_call.1} parent=1 // pred_fallthru
      _
    // Predicated region
    $region22: #{tpu_custom_call.1} parent=1 // pred_check
      _
    $region23: #{tpu_custom_call.1} parent=1 // pred_check_branch
      %56 = sbr.rel (0) target = $region25
    $region24: #{tpu_custom_call.1} parent=1 // pred_region
      _
    $region25: #{tpu_custom_call.1} parent=1 // pred_fallthru
      _
    // Predicated region
    $region26: #{tpu_custom_call.1} parent=1 // pred_check
      _
    $region27: #{tpu_custom_call.1} parent=1 // pred_check_branch
      %58 = sbr.rel (0) target = $region29
    $region28: #{tpu_custom_call.1} parent=1 // pred_region
      %60 = dma.done [#allocation3], 128
    $region29: #{tpu_custom_call.1} parent=1 // pred_fallthru
      _
    // Predicated region
    $region30: #{tpu_custom_call.1} parent=1 // pred_check
      _
    $region31: #{tpu_custom_call.1} parent=1 // pred_check_branch
      %62 = sbr.rel (0) target = $region33
    $region32: #{tpu_custom_call.1} parent=1 // pred_region
      %64 = dma.done [#allocation6], 512
    $region33: #{tpu_custom_call.1} parent=1 // pred_fallthru
      _
    // Predicated region
    $region34: #{tpu_custom_call.1} parent=1 // pred_check
      _
    $region35: #{tpu_custom_call.1} parent=1 // pred_check_branch
      %66 = sbr.rel (0) target = $region37
    $region36: #{tpu_custom_call.1} parent=1 // pred_region
      %68 = dma.done [#allocation6], 1024
    $region37: #{tpu_custom_call.1} parent=1 // pred_fallthru
      _
    %v69 = vld [vmem:[#allocation2] sm:$0xff]
    %v70 = vld [vmem:[#allocation5] sm:$0xff]
    %v71 = vld [vmem:[#allocation5 + $0x8] sm:$0xff]
    %v72 = vld [vmem:[#allocation5 + $0x10] sm:$0xff]
    %v73 = vld [vmem:[#allocation5 + $0x18] sm:$0xff]
    %v74 = vld [vmem:[%s4] sm:$0x1]
    %v75 = vperm.slane %v74, 0
    %vm76 = vcmask 261120
    %v78 = vsel %vm76, %v69, 0
    %80 = vmatpush.msra.mxu0 0.0
    %81 = vmatpush.msra.mxu0 0.0
    %82 = vmatpush.msra.mxu0 0.0
    %83 = vmatpush.msra.mxu0 0.0
    %84 = vmatpush.msra.mxu0 0.0
    %85 = vmatpush.msra.mxu0 0.0
    %86 = vmatpush.msra.mxu0 0.0
    %87 = vmatpush.msra.mxu0 0.0
    %88 = vmatpush.msra.mxu0 0.0
    %89 = vmatpush.msra.mxu0 0.0
    %90 = vmatpush.msra.mxu0 0.0
    %91 = vmatpush.msra.mxu0 0.0
    %92 = vmatpush.msra.mxu0 %v73
    %93 = vmatpush.msra.mxu0 %v72
    %94 = vmatpush.msra.mxu0 %v71
    %95 = vmatpush.msra.mxu0 %v70
    %96 = vmatmul.f32.gmra.mxu0 %v78
    %v97 = vpop.f32.mrf.mxu0
    %v98 = vadd.f32 %v75, %v97
    %99 = vdwg.mxu0
    %v100 = vmax.f32 %v98, 0.0
    %v101 = vld [vmem:[#allocation7] sm:$0xff]
    %v102 = vld [vmem:[#allocation7 + $0x8] sm:$0xff]
    %v103 = vld [vmem:[#allocation7 + $0x10] sm:$0xff]
    %v104 = vld [vmem:[#allocation7 + $0x18] sm:$0xff]
    %v105 = vld [vmem:[#allocation7 + $0x20] sm:$0xff]
    %v106 = vld [vmem:[#allocation7 + $0x28] sm:$0xff]
    %v107 = vld [vmem:[#allocation7 + $0x30] sm:$0xff]
    %v108 = vld [vmem:[#allocation7 + $0x38] sm:$0xff]
    %v109 = vld [vmem:[%s4 + $0x1] sm:$0x1]
    %v110 = vperm.slane %v109, 0
    %vm111 = vcmask 523264
    %v113 = vsel %vm111, %v100, 0
    %115 = vmatpush.msra.mxu0 0.0
    %116 = vmatpush.msra.mxu0 0.0
    %117 = vmatpush.msra.mxu0 0.0
    %118 = vmatpush.msra.mxu0 0.0
    %119 = vmatpush.msra.mxu0 0.0
    %120 = vmatpush.msra.mxu0 0.0
    %121 = vmatpush.msra.mxu0 0.0
    %122 = vmatpush.msra.mxu0 0.0
    %123 = vmatpush.msra.mxu0 %v108
    %124 = vmatpush.msra.mxu0 %v107
    %125 = vmatpush.msra.mxu0 %v106
    %126 = vmatpush.msra.mxu0 %v105
    %127 = vmatpush.msra.mxu0 %v104
    %128 = vmatpush.msra.mxu0 %v103
    %129 = vmatpush.msra.mxu0 %v102
    %130 = vmatpush.msra.mxu0 %v101
    %131 = vmatmul.f32.gmra.mxu0 %v113
    %v132 = vpop.f32.mrf.mxu0
    %v133 = vadd.f32 %v110, %v132
    %134 = vdwg.mxu0
    %v135 = vmax.f32 %v133, 0.0
    %v136 = vld [vmem:[%s3] sm:$0x3]
    %v137 = vld [vmem:[%s5] sm:$0x3]
    %139 = vset.pattern.permute.xlu0 0
    %140 = vperm.xlu0 %139, %v137
    %v141 = vpop.permute.xlu0 %140
    %v144 = vsel %vm111, %v136, 0
    %v147 = vsel %vm111, %v135, 0
    %149 = vmatpush.xpose.msra.mxu0 0.0
    %150 = vmatpush.xpose.msra.mxu0 0.0
    %151 = vmatpush.xpose.msra.mxu0 0.0
    %152 = vmatpush.xpose.msra.mxu0 0.0
    %153 = vmatpush.xpose.msra.mxu0 0.0
    %154 = vmatpush.xpose.msra.mxu0 0.0
    %155 = vmatpush.xpose.msra.mxu0 0.0
    %156 = vmatpush.xpose.msra.mxu0 0.0
    %157 = vmatpush.xpose.msra.mxu0 0.0
    %158 = vmatpush.xpose.msra.mxu0 0.0
    %159 = vmatpush.xpose.msra.mxu0 0.0
    %160 = vmatpush.xpose.msra.mxu0 0.0
    %161 = vmatpush.xpose.msra.mxu0 0.0
    %162 = vmatpush.xpose.msra.mxu0 0.0
    %163 = vmatpush.xpose.msra.mxu0 0.0
    %164 = vmatpush.xpose.msra.mxu0 %v147
    %165 = vmatmul.f32.gmra.mxu0 %v144
    %v166 = vpop.f32.mrf.mxu0
    %v167 = vadd.f32 %v141, %v166
    %168 = vdwg.mxu0
    %vm169 = vcmask 58368
    %170 = vst.msk [vmem:[#allocation8] sm:$0x3] %vm169, %v167
    // Predicated region
    $region38: #{tpu_custom_call.1} parent=1 // pred_check
      _
    $region39: #{tpu_custom_call.1} parent=1 // pred_check_branch
      %172 = sbr.rel (0) target = $region41
    $region40: #{tpu_custom_call.1} parent=1 // pred_region
      %174 = vsyncadd [#allocation4], 0
      %s176 = sshll.u32 [#allocation8], 4
      %s177 = int_to_ptr.vmem [resolvable:$true] %s176
      %s178 = sshll.u32 %s6, 4
      %s179 = int_to_ptr.hbm [resolvable:$true] %s178
      %181 = dma.vmem_to_hbm [thread:$0]  %s177, 32, %s179, [#allocation4]
    $region41: #{tpu_custom_call.1} parent=1 // pred_fallthru
      _
    // Predicated region
    $region42: #{tpu_custom_call.1} parent=1 // pred_check
      _
    $region43: #{tpu_custom_call.1} parent=1 // pred_check_branch
      %183 = sbr.rel (0) target = $region45
    $region44: #{tpu_custom_call.1} parent=1 // pred_region
      %185 = dma.done [#allocation4], 32
    $region45: #{tpu_custom_call.1} parent=1 // pred_fallthru
      _
    %186 = vsyncpa [#allocation3], 1
    %187 = vsyncpa [#allocation6], 1
    %188 = vsyncpa [#allocation4], 1

</llo_original>
